<compile_context>
chip_gen: v7x
topology: tpu7x:2x2x1
jax: 0.10.0
libtpu: 0.0.40
codegen_flags: <defaults>
</compile_context>

<pallas_src>
import jax
import jax.numpy as jnp
from jax.experimental import pallas as pl
from jax.experimental.pallas import tpu as pltpu


# ----------------------------------------------------------------------------
# Fused forward + gradient kernel (scalar, SMEM-only).
# One launch yields both the loss and d(loss)/d(x,y), so an optimizer step
# pays the pallas_call overhead exactly once.
# ----------------------------------------------------------------------------
def rosenbrock_fwd_grad_kernel(p_ref, loss_ref, grad_ref):
    # p_ref:    SMEM (2,)  -> (x, y)
    # loss_ref: SMEM (1,)  -> scalar loss
    # grad_ref: SMEM (2,)  -> (dL/dx, dL/dy)
    x = p_ref[0]
    y = p_ref[1]
    one = jnp.float32(1.0)
    a = one - x            # hoisted shared subexpression
    b = y - x * x          # hoisted shared subexpression
    loss_ref[0] = a * a + jnp.float32(100.0) * b * b
    grad_ref[0] = jnp.float32(-2.0) * a - jnp.float32(400.0) * x * b
    grad_ref[1] = jnp.float32(200.0) * b


def _rosenbrock_value_and_grad(params: jax.Array):
    loss, grad = pl.pallas_call(
        rosenbrock_fwd_grad_kernel,
        out_shape=(
            jax.ShapeDtypeStruct((1,), jnp.float32),
            jax.ShapeDtypeStruct((2,), jnp.float32),
        ),
        in_specs=[pl.BlockSpec(memory_space=pltpu.MemorySpace.SMEM)],
        out_specs=(
            pl.BlockSpec(memory_space=pltpu.MemorySpace.SMEM),
            pl.BlockSpec(memory_space=pltpu.MemorySpace.SMEM),
        ),
    )(params)
    return loss[0], grad


# Differentiable wrapper: forward semantics identical to the PyTorch module's
# forward(); gradient comes from the same single kernel launch.
@jax.custom_vjp
def rosenbrock_pallas(params: jax.Array) -> jax.Array:
    loss, _ = _rosenbrock_value_and_grad(params)
    return loss


def _rosenbrock_fwd(params):
    loss, grad = _rosenbrock_value_and_grad(params)
    return loss, grad


def _rosenbrock_bwd(grad_residual, g):
    return (g * grad_residual,)


rosenbrock_pallas.defvjp(_rosenbrock_fwd, _rosenbrock_bwd)


# ----------------------------------------------------------------------------
# Batched kernel: N = 8*128 candidate (x, y) points per launch, VPU elementwise
# in VMEM.  Amortizes the fixed dispatch/DMA overhead ~1000x for repeated
# evaluation workloads (line search, populations, sweeps).  f32 throughout,
# so it is portable to v5e (no bf16 VPU) as well as v6e/v7x.
# ----------------------------------------------------------------------------
def rosenbrock_batched_kernel(x_ref, y_ref, o_ref):
    x = x_ref[...]
    y = y_ref[...]
    a = 1.0 - x
    b = y - x * x
    o_ref[...] = a * a + 100.0 * b * b


def rosenbrock_pallas_batched(x: jax.Array, y: jax.Array) -> jax.Array:
    """x, y: float32[8, 128] -> float32[8, 128] of Rosenbrock values."""
    return pl.pallas_call(
        rosenbrock_batched_kernel,
        out_shape=jax.ShapeDtypeStruct(x.shape, jnp.float32),
        in_specs=[
            pl.BlockSpec(memory_space=pltpu.MemorySpace.VMEM),
            pl.BlockSpec(memory_space=pltpu.MemorySpace.VMEM),
        ],
        out_specs=pl.BlockSpec(memory_space=pltpu.MemorySpace.VMEM),
    )(x, y)


# ----------------------------------------------------------------------------
# Pure-JAX references.
# ----------------------------------------------------------------------------
def rosenbrock_ref(params: jax.Array) -> jax.Array:
    x, y = params[0], params[1]
    return (1.0 - x) ** 2 + 100.0 * (y - x * x) ** 2


def rosenbrock_grad_ref(params: jax.Array) -> jax.Array:
    x, y = params[0], params[1]
    b = y - x * x
    return jnp.stack([-2.0 * (1.0 - x) - 400.0 * x * b, 200.0 * b])


if __name__ == "__main__":
    key = jax.random.PRNGKey(0)

    # --- scalar forward (matches the module's default init value) -----------
    init_val = jnp.array([-1.2, 1.0], dtype=jnp.float32)

    loss = jax.block_until_ready(rosenbrock_pallas(init_val))
    loss_ref = rosenbrock_ref(init_val)
    assert jnp.allclose(loss, loss_ref, rtol=1e-6, atol=1e-6), (
        f"loss mismatch: got {loss}, expected {loss_ref}"
    )

    # --- fused gradient (single launch; usable by jax.grad / optimizers) ----
    grad = jax.block_until_ready(jax.grad(rosenbrock_pallas)(init_val))
    grad_ref = rosenbrock_grad_ref(init_val)
    assert jnp.allclose(grad, grad_ref, rtol=1e-5, atol=1e-5), (
        f"grad mismatch: got {grad}, expected {grad_ref}"
    )

    # --- batched evaluation (amortizes launch overhead over 1024 points) ----
    kx, ky = jax.random.split(key)
    xb = jax.random.normal(kx, (8, 128), dtype=jnp.float32)
    yb = jax.random.normal(ky, (8, 128), dtype=jnp.float32)
    losses = jax.block_until_ready(rosenbrock_pallas_batched(xb, yb))
    losses_ref = (1.0 - xb) ** 2 + 100.0 * (yb - xb * xb) ** 2
    assert jnp.allclose(losses, losses_ref, rtol=1e-5, atol=1e-5), (
        "batched loss mismatch"
    )

    print("KERNEL_OK")
</pallas_src>

<mosaic_0001>
module attributes {stable_mosaic.version = 11 : i64} {
  func.func @rosenbrock_fwd_grad_kernel(%arg0: memref<2xf32, #tpu.memory_space<smem>>, %arg1: memref<1xf32, #tpu.memory_space<smem>>, %arg2: memref<2xf32, #tpu.memory_space<smem>>) attributes {dimension_semantics = [], scalar_prefetch = 0 : i64, scratch_operands = 0 : i64, tpu.core_type = #tpu.core_type<tc>} {
    %c0 = arith.constant 0 : index
    %0 = memref.load %arg0[%c0] : memref<2xf32, #tpu.memory_space<smem>>
    %c1 = arith.constant 1 : index
    %1 = memref.load %arg0[%c1] : memref<2xf32, #tpu.memory_space<smem>>
    %cst = arith.constant 1.000000e+00 : f32
    %2 = arith.subf %cst, %0 : f32
    %3 = arith.mulf %0, %0 : f32
    %4 = arith.subf %1, %3 : f32
    %5 = arith.mulf %2, %2 : f32
    %cst_0 = arith.constant 1.000000e+02 : f32
    %6 = arith.mulf %cst_0, %4 : f32
    %7 = arith.mulf %6, %4 : f32
    %8 = arith.addf %5, %7 : f32
    %c0_1 = arith.constant 0 : index
    %9 = memref.load %arg1[%c0_1] : memref<1xf32, #tpu.memory_space<smem>>
    memref.store %8, %arg1[%c0_1] : memref<1xf32, #tpu.memory_space<smem>>
    %cst_2 = arith.constant -2.000000e+00 : f32
    %10 = arith.mulf %cst_2, %2 : f32
    %cst_3 = arith.constant 4.000000e+02 : f32
    %11 = arith.mulf %cst_3, %0 : f32
    %12 = arith.mulf %11, %4 : f32
    %13 = arith.subf %10, %12 : f32
    %c0_4 = arith.constant 0 : index
    %14 = memref.load %arg2[%c0_4] : memref<2xf32, #tpu.memory_space<smem>>
    memref.store %13, %arg2[%c0_4] : memref<2xf32, #tpu.memory_space<smem>>
    %cst_5 = arith.constant 2.000000e+02 : f32
    %15 = arith.mulf %cst_5, %4 : f32
    %c1_6 = arith.constant 1 : index
    %16 = memref.load %arg2[%c1_6] : memref<2xf32, #tpu.memory_space<smem>>
    memref.store %15, %arg2[%c1_6] : memref<2xf32, #tpu.memory_space<smem>>
    return
  }
}

</mosaic_0001>

<llo_original>
// kernel: tpu_custom_call.1
$region0: #{tpu_custom_call.1}
  #allocation0 [shape = 'u32[]', space=smem, size = 0x4, offset = 0x4, fixed_abs, tag = 'smem constant byte address 0x4 - core index']
  #allocation1 [shape = 'u32[144,128]{1,0:T(1,128)}', space=vmem, size = 0x12000, scoped, tag = 'internal scratch']
  %s0 = inlined_call_operand.hbm [shape: f32[2], index: 0, kind: input, shape index: {}]
  %s1 = inlined_call_operand.hbm [shape: f32[1], index: 1, kind: output, shape index: {0}]
  %s2 = inlined_call_operand.hbm [shape: f32[2], index: 2, kind: output, shape index: {1}]
  %3 = xla_tuple %s1, %s2
  %s4 = sld [smem:[#allocation0]]
  $region26: #{tpu_custom_call.1} parent=0
    _
  %s6 = ssub.s32 1, %s4
  %s7 = scalar_select 0, %s6, %s4
  $region1: #{tpu_custom_call.1} parent=0
    #allocation2 [shape = 'u8[512]{0}', space=smem, size = 0x200, scoped, tag = 'input window, operand 0, single buffered']
    #allocation3 [shape = 's32[1]{0}', space=sflag, size = 0x4, scoped, tag = 'scoped memory for tpu_custom_call.1']
    #allocation4 [shape = 's32[1]{0}', space=sflag, size = 0x4, scoped, tag = 'scoped memory for tpu_custom_call.1']
    #allocation5 [shape = 'u8[512]{0}', space=smem, size = 0x200, scoped, tag = 'output window, operand 0, single buffered']
    #allocation6 [shape = 'u8[512]{0}', space=smem, size = 0x200, scoped, tag = 'output window, operand 1, single buffered']
    #allocation7 [shape = 's32[1]{0}', space=sflag, size = 0x4, scoped, tag = 'scoped memory for tpu_custom_call.1']
    %8 = vsyncpa [#allocation3], 0
    %9 = vsyncpa [#allocation4], 0
    %10 = vsyncpa [#allocation7], 0
    // Predicated region
    $region2: #{tpu_custom_call.1} parent=1 // pred_check
      _
    $region3: #{tpu_custom_call.1} parent=1 // pred_check_branch
      %12 = sbr.rel (0) target = $region5
    $region4: #{tpu_custom_call.1} parent=1 // pred_region
      %s14 = ssub.s32 16, 16
      %15 = vsyncadd [#allocation3], %s14
      %18 = dma.hbm_to_smem %s0, 16, [#allocation2], [#allocation3]
    $region5: #{tpu_custom_call.1} parent=1 // pred_fallthru
      _
    // Predicated region
    $region6: #{tpu_custom_call.1} parent=1 // pred_check
      _
    $region7: #{tpu_custom_call.1} parent=1 // pred_check_branch
      %20 = sbr.rel (0) target = $region9
    $region8: #{tpu_custom_call.1} parent=1 // pred_region
      %21 = dma.done [#allocation3], 16
    $region9: #{tpu_custom_call.1} parent=1 // pred_fallthru
      _
    %22 = sfence
    %s23 = sld [smem:[#allocation2]]
    %s24 = sld [smem:[#allocation2 + $0x1]]
    %s25 = ssub.f32 1.0, %s23
    %s26 = smul.f32 %s23, %s23
    %s27 = ssub.f32 %s24, %s26
    %s28 = smul.f32 %s25, %s25
    %s29 = smul.f32 %s27, 100.0
    %s30 = smul.f32 %s29, %s27
    %s31 = sadd.f32 %s28, %s30
    %s32 = scalar_lea.smem [#allocation5], 0
    %33 = sst [smem:[%s32]] %s31
    %s34 = smul.f32 %s25, -2.0
    %s35 = smul.f32 %s23, 400.0
    %s36 = smul.f32 %s35, %s27
    %s37 = ssub.f32 %s34, %s36
    %s38 = scalar_lea.smem [#allocation6], 0
    %39 = sst [smem:[%s38]] %s37
    %s40 = smul.f32 %s27, 200.0
    %s41 = scalar_lea.smem [#allocation6], 1
    %42 = sst [smem:[%s41]] %s40
    // Predicated region
    $region10: #{tpu_custom_call.1} parent=1 // pred_check
      _
    $region11: #{tpu_custom_call.1} parent=1 // pred_check_branch
      %44 = sbr.rel (0) target = $region13
    $region12: #{tpu_custom_call.1} parent=1 // pred_region
      %s46 = ssub.s32 16, 16
      %47 = vsyncadd [#allocation4], %s46
      %50 = dma.smem_to_hbm [#allocation5], 16, %s1, [#allocation4]
    $region13: #{tpu_custom_call.1} parent=1 // pred_fallthru
      _
    // Predicated region
    $region14: #{tpu_custom_call.1} parent=1 // pred_check
      _
    $region15: #{tpu_custom_call.1} parent=1 // pred_check_branch
      %52 = sbr.rel (0) target = $region17
    $region16: #{tpu_custom_call.1} parent=1 // pred_region
      %s54 = ssub.s32 16, 16
      %55 = vsyncadd [#allocation7], %s54
      %58 = dma.smem_to_hbm [#allocation6], 16, %s2, [#allocation7]
    $region17: #{tpu_custom_call.1} parent=1 // pred_fallthru
      _
    // Predicated region
    $region18: #{tpu_custom_call.1} parent=1 // pred_check
      _
    $region19: #{tpu_custom_call.1} parent=1 // pred_check_branch
      %60 = sbr.rel (0) target = $region21
    $region20: #{tpu_custom_call.1} parent=1 // pred_region
      %61 = dma.done [#allocation4], 16
    $region21: #{tpu_custom_call.1} parent=1 // pred_fallthru
      _
    // Predicated region
    $region22: #{tpu_custom_call.1} parent=1 // pred_check
      _
    $region23: #{tpu_custom_call.1} parent=1 // pred_check_branch
      %63 = sbr.rel (0) target = $region25
    $region24: #{tpu_custom_call.1} parent=1 // pred_region
      %64 = dma.done [#allocation7], 16
    $region25: #{tpu_custom_call.1} parent=1 // pred_fallthru
      _
    %65 = sfence
    %66 = vsyncpa [#allocation3], 1
    %67 = vsyncpa [#allocation4], 1
    %68 = vsyncpa [#allocation7], 1

</llo_original>
